<compile_context>
chip_gen: v5e
topology: v5e:2x2
jax: 0.10.0
libtpu: 0.0.40
codegen_flags: <defaults>
</compile_context>

<pallas_src>
import functools

import jax
import jax.numpy as jnp
from jax import lax
from jax.experimental import pallas as pl
from jax.experimental.pallas import tpu as pltpu

EPS = 1e-5                      # nn.LayerNorm default
HI = lax.Precision.HIGHEST      # f32-accurate MXU passes


def _round_up(n, m):
    return (n + m - 1) // m * m


def _vmem_capacity_bytes():
    try:
        return int(getattr(pltpu.get_tpu_info(), "vmem_capacity_bytes", 64 << 20))
    except Exception:
        return 64 << 20          # conservative (v7x-sized) fallback


def _maybe_vmem_limit(need_bytes, phys):
    """vmem_limit_bytes to request, or None to keep the compiler default."""
    want = int(need_bytes * 1.25)            # slack for compiler-internal temps
    if want <= (32 << 20):                   # default scoped limit already enough
        return None
    cap = int(phys * 0.84)                   # ~53 MiB on v7x, ~107 MiB on v5e/v6e
    # TODO(synk): if `want` exceeds `cap` (very large D), tile the projection
    # K/N dims with an accumulator grid axis instead of keeping weights resident.
    return min(want, cap)


def _layernorm_1pass(x, gamma, beta, inv_d):
    """Single-sweep LayerNorm over the (zero-padded) last dim; divisor = true D."""
    s1 = jnp.sum(x, axis=-1, keepdims=True)
    s2 = jnp.sum(x * x, axis=-1, keepdims=True)
    mu = s1 * inv_d
    var = jnp.maximum(s2 * inv_d - mu * mu, 0.0)
    return (x - mu) * lax.rsqrt(var + EPS) * gamma + beta


# Vector-bank rows (one (8, D_pad) block replaces 7+ tiny BlockSpec buffers).
_G1, _BE1, _CQK, _BV, _G2, _BE2, _BL = range(7)


def _score_kernel(x_ref, m_ref, vec_ref, s_ref, *, inv_d, score_prec):
    vecs = vec_ref[...]
    xt = x_ref[...].astype(jnp.float32)
    h = _layernorm_1pass(xt, vecs[_G1:_G1 + 1], vecs[_BE1:_BE1 + 1], inv_d)
    # score_b = h_b M h_b^T + h_b c ; the constant bq.bk is dropped (softmax is
    # shift invariant).  One (TB,D)x(D,D) matmul + a lane reduction per tile.
    hm = jnp.dot(h, m_ref[...], precision=score_prec,
                 preferred_element_type=jnp.float32) + vecs[_CQK:_CQK + 1]
    s_ref[...] = jnp.sum(hm * h, axis=-1, keepdims=True)


def _output_kernel(x_ref, w_ref, wv_ref, wl_ref, vec_ref, o_ref, *, inv_d, vw_prec):
    vecs = vec_ref[...]
    xt = x_ref[...].astype(jnp.float32)
    # LN1 is recomputed here (cheap VPU work) instead of round-tripping h via HBM.
    h = _layernorm_1pass(xt, vecs[_G1:_G1 + 1], vecs[_BE1:_BE1 + 1], inv_d)
    v = jnp.dot(h.astype(wv_ref.dtype), wv_ref[...], precision=vw_prec,
                preferred_element_type=jnp.float32) + vecs[_BV:_BV + 1]
    x1 = xt + w_ref[...] * v                                   # residual 1
    h2 = _layernorm_1pass(x1, vecs[_G2:_G2 + 1], vecs[_BE2:_BE2 + 1], inv_d)
    lin = jnp.dot(h2.astype(wl_ref.dtype), wl_ref[...], precision=vw_prec,
                  preferred_element_type=jnp.float32) + vecs[_BL:_BL + 1]
    o_ref[...] = (x1 + lin).astype(o_ref.dtype)                # residual 2


def attention_block(x, params, *, precise=False, tile_rows=None, score_precision=HI):
    """x: (B, D) float32; params: PyTorch-convention weights (see make_params)."""
    B, D = x.shape
    f32 = jnp.float32
    D_pad = _round_up(D, 128)
    phys_vmem = _vmem_capacity_bytes()

    # Batch tile: 512 rows on 128-MiB-VMEM parts (v5e/v6e), 256 on 64-MiB parts (v7x).
    if tile_rows is None:
        tile_rows = 512 if phys_vmem > (64 << 20) else 256
    TB = _round_up(min(tile_rows, _round_up(B, 8)), 8)
    nbt = pl.cdiv(B, TB)
    B_pad = nbt * TB
    inv_d = 1.0 / D

    mxu_dtype = f32 if precise else jnp.bfloat16
    vw_prec = HI if precise else None

    # ---- host-side parameter prep (f32, HIGHEST precision for the score algebra) ----
    def pad_vec(v):
        return jnp.zeros((D_pad,), f32).at[:D].set(v.astype(f32))

    def pad_mat(m):                     # (D, D) -> (D_pad, D_pad)
        return jnp.zeros((D_pad, D_pad), f32).at[:D, :D].set(m.astype(f32))

    wq, wk = params["wq"].astype(f32), params["wk"].astype(f32)
    bq, bk = params["bq"].astype(f32), params["bk"].astype(f32)
    m_qk = pad_mat(jnp.dot(wq.T, wk, precision=HI))            # stays f32
    c_qk = jnp.dot(wq.T, bk, precision=HI) + jnp.dot(wk.T, bq, precision=HI)

    wv = pad_mat(params["wv"].T).astype(mxu_dtype)             # torch (out,in) -> (in,out)
    wl = pad_mat(params["wl"].T).astype(mxu_dtype)

    # Zero-padded gamma/beta keep every padded lane identically zero after LN.
    vec_bank = jnp.stack([
        pad_vec(params["g1"]), pad_vec(params["be1"]), pad_vec(c_qk),
        pad_vec(params["bv"]), pad_vec(params["g2"]), pad_vec(params["be2"]),
        pad_vec(params["bl"]), jnp.zeros((D_pad,), f32),
    ])                                                          # (8, D_pad)

    x_pad = jnp.zeros((B_pad, D_pad), f32).at[:B, :D].set(x.astype(f32))

    # Resident (constant-index) blocks: single-buffer them once they are large
    # enough that double buffering matters for VMEM (v7x's 64 MiB budget).
    single_buf = D_pad * D_pad * jnp.dtype(mxu_dtype).itemsize >= (2 << 20)

    def resident(shape):
        if single_buf:
            return pl.BlockSpec(shape, lambda i: (0, 0), pipeline_mode=pl.Buffered(1))
        return pl.BlockSpec(shape, lambda i: (0, 0))

    row_spec = pl.BlockSpec((TB, D_pad), lambda i: (i, 0))
    col_spec = pl.BlockSpec((TB, 1), lambda i: (i, 0))
    w_bufs = 1 if single_buf else 2

    # ---------------- call 1: per-row scores ----------------
    need1 = (2 * TB * D_pad * 4 + 2 * TB * 128 * 4
             + w_bufs * (D_pad * D_pad + 8 * D_pad) * 4
             + 4 * TB * D_pad * 4)                   # live temps: h, h@M, ...
    cp1 = dict(dimension_semantics=("parallel",))
    lim1 = _maybe_vmem_limit(need1, phys_vmem)
    if lim1 is not None:
        cp1["vmem_limit_bytes"] = lim1

    scores = pl.pallas_call(
        functools.partial(_score_kernel, inv_d=inv_d, score_prec=score_precision),
        grid=(nbt,),
        in_specs=[row_spec, resident((D_pad, D_pad)), resident((8, D_pad))],
        out_specs=col_spec,
        out_shape=jax.ShapeDtypeStruct((B_pad, 1), f32),
        compiler_params=pltpu.CompilerParams(**cp1),
    )(x_pad, m_qk, vec_bank)

    # Softmax over the *batch* dimension: a tiny (B,) reduction -> plain XLA.
    w = jax.nn.softmax(scores[:B, 0])
    w_pad = jnp.zeros((B_pad, 1), f32).at[:B, 0].set(w)

    # ---------------- call 2: V projection, residuals, LN2, Linear ----------------
    w_item = jnp.dtype(mxu_dtype).itemsize
    need2 = (2 * TB * D_pad * 4 + 2 * TB * 128 * 4 + 2 * TB * D_pad * 4
             + w_bufs * (2 * D_pad * D_pad * w_item + 8 * D_pad * 4)
             + 6 * TB * D_pad * 4)                   # temps: h, v, x1, h2, lin, ...
    cp2 = dict(dimension_semantics=("parallel",))
    lim2 = _maybe_vmem_limit(need2, phys_vmem)
    if lim2 is not None:
        cp2["vmem_limit_bytes"] = lim2

    out_pad = pl.pallas_call(
        functools.partial(_output_kernel, inv_d=inv_d, vw_prec=vw_prec),
        grid=(nbt,),
        in_specs=[row_spec, col_spec,
                  resident((D_pad, D_pad)), resident((D_pad, D_pad)),
                  resident((8, D_pad))],
        out_specs=row_spec,
        out_shape=jax.ShapeDtypeStruct((B_pad, D_pad), x.dtype),
        compiler_params=pltpu.CompilerParams(**cp2),
    )(x_pad, w_pad, wv, wl, vec_bank)

    return out_pad[:B, :D]


def attention_block_ref(x, params):
    """Pure-JAX reference mirroring the PyTorch forward (f32-accurate matmuls)."""
    def ln(v, g, b):
        mu = jnp.mean(v, axis=-1, keepdims=True)
        var = jnp.mean((v - mu) ** 2, axis=-1, keepdims=True)
        return (v - mu) * lax.rsqrt(var + EPS) * g + b

    h = ln(x, params["g1"], params["be1"])
    q = jnp.dot(h, params["wq"].T, precision=HI) + params["bq"]
    k = jnp.dot(h, params["wk"].T, precision=HI) + params["bk"]
    v = jnp.dot(h, params["wv"].T, precision=HI) + params["bv"]
    scores = jnp.sum(q * k, axis=-1)                 # (B,)
    w = jax.nn.softmax(scores, axis=-1)              # softmax over the batch dim
    x1 = x + w[:, None] * v
    h2 = ln(x1, params["g2"], params["be2"])
    return x1 + jnp.dot(h2, params["wl"].T, precision=HI) + params["bl"]


def make_params(key, D):
    ks = jax.random.split(key, 8)
    s = 1.0 / jnp.sqrt(D)
    return {
        "wq": jax.random.uniform(ks[0], (D, D), jnp.float32, -s, s),
        "bq": jax.random.uniform(ks[1], (D,), jnp.float32, -s, s),
        "wk": jax.random.uniform(ks[2], (D, D), jnp.float32, -s, s),
        "bk": jax.random.uniform(ks[3], (D,), jnp.float32, -s, s),
        "wv": jax.random.uniform(ks[4], (D, D), jnp.float32, -s, s),
        "bv": jax.random.uniform(ks[5], (D,), jnp.float32, -s, s),
        "wl": jax.random.uniform(ks[6], (D, D), jnp.float32, -s, s),
        "bl": jax.random.uniform(ks[7], (D,), jnp.float32, -s, s),
        "g1": jnp.ones((D,), jnp.float32),
        "be1": jnp.zeros((D,), jnp.float32),
        "g2": jnp.ones((D,), jnp.float32),
        "be2": jnp.zeros((D,), jnp.float32),
    }


if __name__ == "__main__":
    key = jax.random.PRNGKey(0)
    kx, kp, kx2 = jax.random.split(key, 3)

    # Small shapes consistent with the module: embed_dim=32, batch=8.
    B, D = 8, 32
    x = jax.random.normal(kx, (B, D), jnp.float32)
    params = make_params(kp, D)
    ref = attention_block_ref(x, params)

    # Precise path (f32 MXU operands everywhere) -- tight tolerance.
    out = jax.block_until_ready(attention_block(x, params, precise=True))
    assert out.shape == (B, D)
    assert jnp.allclose(out, ref, atol=5e-4, rtol=5e-4), "precise kernel mismatch"

    # Fast path (bf16 wv/wl MXU operands, f32 scores) -- looser tolerance.
    out_fast = jax.block_until_ready(attention_block(x, params))
    assert out_fast.shape == (B, D)
    assert jnp.allclose(out_fast, ref, atol=1e-1, rtol=1e-1), "fast kernel mismatch"

    # Multi-tile batch: exercises batch tiling, row padding, and the two-call softmax.
    B2 = 40
    x2 = jax.random.normal(kx2, (B2, D), jnp.float32)
    ref2 = attention_block_ref(x2, params)
    out2 = jax.block_until_ready(attention_block(x2, params, precise=True, tile_rows=16))
    assert jnp.allclose(out2, ref2, atol=5e-4, rtol=5e-4), "multi-tile kernel mismatch"

    print("KERNEL_OK")
</pallas_src>

<mosaic_0001>
module attributes {stable_mosaic.version = 11 : i64} {
  func.func @_score_kernel(%arg0: i32, %arg1: memref<8x128xf32, #tpu.memory_space<vmem>>, %arg2: memref<128x128xf32, #tpu.memory_space<vmem>>, %arg3: memref<8x128xf32, #tpu.memory_space<vmem>>, %arg4: memref<8x1xf32, #tpu.memory_space<vmem>>) attributes {dimension_semantics = [#tpu.dimension_semantics<parallel>], iteration_bounds = array<i64: 1>, scalar_prefetch = 0 : i64, scratch_operands = 0 : i64, tpu.core_type = #tpu.core_type<tc>, window_params = [{transform_indices = @transform_0, window_bounds = array<i64: 8, 128>}, {pipeline_mode = #tpu.pipeline_mode<synchronous>, transform_indices = @transform_1, window_bounds = array<i64: 128, 128>}, {pipeline_mode = #tpu.pipeline_mode<synchronous>, transform_indices = @transform_2, window_bounds = array<i64: 8, 128>}, {transform_indices = @transform_3, window_bounds = array<i64: 8, 1>}]} {
    %c0 = arith.constant 0 : index
    %c0_0 = arith.constant 0 : index
    %0 = vector.load %arg3[%c0, %c0_0] : memref<8x128xf32, #tpu.memory_space<vmem>>, vector<8x128xf32>
    %c0_1 = arith.constant 0 : index
    %c0_2 = arith.constant 0 : index
    %1 = vector.load %arg1[%c0_1, %c0_2] : memref<8x128xf32, #tpu.memory_space<vmem>>, vector<8x128xf32>
    %2 = vector.extract_strided_slice %0 {offsets = [0, 0], sizes = [1, 128], strides = [1, 1]} : vector<8x128xf32> to vector<1x128xf32>
    %3 = vector.extract_strided_slice %0 {offsets = [1, 0], sizes = [1, 128], strides = [1, 1]} : vector<8x128xf32> to vector<1x128xf32>
    %cst = arith.constant dense<0.000000e+00> : vector<8xf32>
    %4 = vector.multi_reduction <add>, %1, %cst [1] : vector<8x128xf32> to vector<8xf32>
    %5 = vector.shape_cast %4 : vector<8xf32> to vector<8x1xf32>
    %6 = arith.mulf %1, %1 : vector<8x128xf32>
    %cst_3 = arith.constant dense<0.000000e+00> : vector<8xf32>
    %7 = vector.multi_reduction <add>, %6, %cst_3 [1] : vector<8x128xf32> to vector<8xf32>
    %8 = vector.shape_cast %7 : vector<8xf32> to vector<8x1xf32>
    %cst_4 = arith.constant 3.125000e-02 : f32
    %9 = vector.broadcast %cst_4 : f32 to vector<8x1xf32>
    %10 = arith.mulf %5, %9 : vector<8x1xf32>
    %cst_5 = arith.constant 3.125000e-02 : f32
    %11 = vector.broadcast %cst_5 : f32 to vector<8x1xf32>
    %12 = arith.mulf %8, %11 : vector<8x1xf32>
    %13 = arith.mulf %10, %10 : vector<8x1xf32>
    %14 = arith.subf %12, %13 : vector<8x1xf32>
    %cst_6 = arith.constant 0.000000e+00 : f32
    %15 = vector.broadcast %cst_6 : f32 to vector<8x1xf32>
    %16 = arith.maximumf %14, %15 : vector<8x1xf32>
    %17 = vector.broadcast %10 : vector<8x1xf32> to vector<8x128xf32>
    %18 = arith.subf %1, %17 : vector<8x128xf32>
    %cst_7 = arith.constant 9.99999974E-6 : f32
    %19 = vector.broadcast %cst_7 : f32 to vector<8x1xf32>
    %20 = arith.addf %16, %19 : vector<8x1xf32>
    %21 = math.rsqrt %20 : vector<8x1xf32>
    %22 = vector.broadcast %21 : vector<8x1xf32> to vector<8x128xf32>
    %23 = arith.mulf %18, %22 : vector<8x128xf32>
    %24 = vector.broadcast %2 : vector<1x128xf32> to vector<8x128xf32>
    %25 = arith.mulf %23, %24 : vector<8x128xf32>
    %26 = vector.broadcast %3 : vector<1x128xf32> to vector<8x128xf32>
    %27 = arith.addf %25, %26 : vector<8x128xf32>
    %c0_8 = arith.constant 0 : index
    %c0_9 = arith.constant 0 : index
    %28 = vector.load %arg2[%c0_8, %c0_9] : memref<128x128xf32, #tpu.memory_space<vmem>>, vector<128x128xf32>
    %cst_10 = arith.constant dense<0.000000e+00> : vector<8x128xf32>
    %29 = tpu.matmul %27, %28, %cst_10 {dimension_numbers = #tpu.dot_dimension_numbers<[1], [0], [0], [1], [0, 0, 1, 1], [], []>, precision = #tpu.contract_precision<fp32>} : vector<8x128xf32>, vector<128x128xf32>, vector<8x128xf32> -> vector<8x128xf32>
    %30 = vector.extract_strided_slice %0 {offsets = [2, 0], sizes = [1, 128], strides = [1, 1]} : vector<8x128xf32> to vector<1x128xf32>
    %31 = vector.broadcast %30 : vector<1x128xf32> to vector<8x128xf32>
    %32 = arith.addf %29, %31 : vector<8x128xf32>
    %33 = arith.mulf %32, %27 : vector<8x128xf32>
    %cst_11 = arith.constant dense<0.000000e+00> : vector<8xf32>
    %34 = vector.multi_reduction <add>, %33, %cst_11 [1] : vector<8x128xf32> to vector<8xf32>
    %35 = vector.shape_cast %34 : vector<8xf32> to vector<8x1xf32>
    %c0_12 = arith.constant 0 : index
    %c0_13 = arith.constant 0 : index
    %36 = vector.load %arg4[%c0_12, %c0_13] : memref<8x1xf32, #tpu.memory_space<vmem>>, vector<8x1xf32>
    tpu.vector_store %arg4[%c0_12, %c0_13], %35 {strides = array<i32>} : memref<8x1xf32, #tpu.memory_space<vmem>>, vector<8x1xf32>,
    return
  }
  func.func @transform_0(%arg0: i32) -> (i32, i32) {
    %c0_i32 = arith.constant 0 : i32
    %c0_i32_0 = arith.constant 0 : i32
    return %arg0, %c0_i32 : i32, i32
  }
  func.func @transform_1(%arg0: i32) -> (i32, i32) {
    %c0_i32 = arith.constant 0 : i32
    %c0_i32_0 = arith.constant 0 : i32
    %c0_i32_1 = arith.constant 0 : i32
    return %c0_i32, %c0_i32_0 : i32, i32
  }
  func.func @transform_2(%arg0: i32) -> (i32, i32) {
    %c0_i32 = arith.constant 0 : i32
    %c0_i32_0 = arith.constant 0 : i32
    %c0_i32_1 = arith.constant 0 : i32
    return %c0_i32, %c0_i32_0 : i32, i32
  }
  func.func @transform_3(%arg0: i32) -> (i32, i32) {
    %c0_i32 = arith.constant 0 : i32
    %c0_i32_0 = arith.constant 0 : i32
    return %arg0, %c0_i32 : i32, i32
  }
}

</mosaic_0001>

<llo_original>
// kernel: tpu_custom_call.1
$region0: #{tpu_custom_call.1}
  #allocation0 [shape = 'u32[]', space=smem, size = 0x4, offset = 0x4, fixed_abs, tag = 'smem constant byte address 0x4 - core index']
  #allocation1 [shape = 'u32[72,128]{1,0:T(1,128)}', space=vmem, size = 0x9000, scoped, tag = 'internal scratch']
  %s0 = inlined_call_operand.hbm [shape: f32[8,128], index: 0, kind: input, shape index: {}]
  %s1 = inlined_call_operand.hbm [shape: f32[128,128], index: 1, kind: input, shape index: {}]
  %s2 = inlined_call_operand.hbm [shape: f32[8,128], index: 2, kind: input, shape index: {}]
  %s3 = inlined_call_operand.vmem [shape: f32[8,1], index: 3, kind: output, shape index: {}]
  %s4 = sld [smem:[#allocation0]]
  $region34: #{tpu_custom_call.1} parent=0
    _
  %s6 = ssub.s32 1, %s4
  %s7 = scalar_select 0, %s6, %s4
  $region1: #{tpu_custom_call.1} parent=0
    #allocation2 [shape = 'u8[4096]{0}', space=vmem, size = 0x1000, scoped, tag = 'input window, operand 0, single buffered']
    #allocation3 [shape = 's32[1]{0}', space=sflag, size = 0x4, scoped, tag = 'scoped memory for tpu_custom_call.1']
    #allocation4 [shape = 'u8[65536]{0}', space=vmem, size = 0x10000, scoped, tag = 'input window, operand 1, single buffered']
    #allocation5 [shape = 's32[1]{0}', space=sflag, size = 0x4, scoped, tag = 'scoped memory for tpu_custom_call.1']
    #allocation6 [shape = 'u8[4096]{0}', space=vmem, size = 0x1000, scoped, tag = 'input window, operand 2, single buffered']
    %8 = vsyncpa [#allocation3], 0
    %9 = vsyncpa [#allocation5], 0
    // Predicated region
    $region2: #{tpu_custom_call.1} parent=1 // pred_check
      _
    $region3: #{tpu_custom_call.1} parent=1 // pred_check_branch
      %11 = sbr.rel (0) target = $region5
    $region4: #{tpu_custom_call.1} parent=1 // pred_region
      %13 = vsyncadd [#allocation3], 0
      %s15 = sshll.u32 %s0, 4
      %s16 = int_to_ptr.hbm [resolvable:$true] %s15
      %s17 = sshll.u32 [#allocation2], 4
      %s18 = int_to_ptr.vmem [resolvable:$true] %s17
      %20 = dma.hbm_to_vmem [thread:$0]  %s16, 128, %s18, [#allocation3]
    $region5: #{tpu_custom_call.1} parent=1 // pred_fallthru
      _
    // Predicated region
    $region6: #{tpu_custom_call.1} parent=1 // pred_check
      _
    $region7: #{tpu_custom_call.1} parent=1 // pred_check_branch
      %22 = sbr.rel (0) target = $region9
    $region8: #{tpu_custom_call.1} parent=1 // pred_region
      %24 = vsyncadd [#allocation5], 0
      %s25 = sshll.u32 %s1, 4
      %s26 = int_to_ptr.hbm [resolvable:$true] %s25
      %s27 = sshll.u32 [#allocation4], 4
      %s28 = int_to_ptr.vmem [resolvable:$true] %s27
      %33 = dma.hbm_to_vmem [thread:$0]  %s26, 2048, %s28, [#allocation5], 128, 128, 8
    $region9: #{tpu_custom_call.1} parent=1 // pred_fallthru
      _
    // Predicated region
    $region10: #{tpu_custom_call.1} parent=1 // pred_check
      _
    $region11: #{tpu_custom_call.1} parent=1 // pred_check_branch
      %35 = sbr.rel (0) target = $region13
    $region12: #{tpu_custom_call.1} parent=1 // pred_region
      %37 = vsyncadd [#allocation5], 0
      %s39 = sshll.u32 %s2, 4
      %s40 = int_to_ptr.hbm [resolvable:$true] %s39
      %s41 = sshll.u32 [#allocation6], 4
      %s42 = int_to_ptr.vmem [resolvable:$true] %s41
      %44 = dma.hbm_to_vmem [thread:$0]  %s40, 128, %s42, [#allocation5]
    $region13: #{tpu_custom_call.1} parent=1 // pred_fallthru
      _
    // Predicated region
    $region14: #{tpu_custom_call.1} parent=1 // pred_check
      _
    $region15: #{tpu_custom_call.1} parent=1 // pred_check_branch
      %46 = sbr.rel (0) target = $region17
    $region16: #{tpu_custom_call.1} parent=1 // pred_region
      %48 = dma.done [#allocation3], 128
    $region17: #{tpu_custom_call.1} parent=1 // pred_fallthru
      _
    // Predicated region
    $region18: #{tpu_custom_call.1} parent=1 // pred_check
      _
    $region19: #{tpu_custom_call.1} parent=1 // pred_check_branch
      %50 = sbr.rel (0) target = $region21
    $region20: #{tpu_custom_call.1} parent=1 // pred_region
      %52 = dma.done [#allocation5], 2048
    $region21: #{tpu_custom_call.1} parent=1 // pred_fallthru
      _
    // Predicated region
    $region22: #{tpu_custom_call.1} parent=1 // pred_check
      _
    $region23: #{tpu_custom_call.1} parent=1 // pred_check_branch
      %54 = sbr.rel (0) target = $region25
    $region24: #{tpu_custom_call.1} parent=1 // pred_region
      %56 = dma.done [#allocation5], 128
    $region25: #{tpu_custom_call.1} parent=1 // pred_fallthru
      _
    %v57 = vld [vmem:[#allocation6] sm:$0xff]
    %v58 = vld [vmem:[#allocation2] sm:$0xff]
    %59 = vadd.xlane.f32.xlu0 %v58
    %v60 = vpop.xlane.xlu0 %59
    %v61 = vmul.f32 %v58, %v58
    %62 = vadd.xlane.f32.xlu0 %v61
    %v63 = vpop.xlane.xlu0 %62
    %v64 = vmul.f32 %v60, 0.03125
    %v65 = vmul.f32 %v63, 0.03125
    %v66 = vmul.f32 %v64, %v64
    %v67 = vsub.f32 %v65, %v66
    %v68 = vmax.f32 %v67, 0.0
    %v69 = vsub.f32 %v58, %v64
    %v70 = vadd.f32 %v68, 1e-05
    %v71 = vrsqrt.pop %v70
    %v72 = vmul.f32 %v71, %v70
    %v73 = vmul.f32 %v72, %v71
    %v74 = vmul.f32 0.5, %v73
    %v75 = vsub.f32 1.5, %v74
    %v76 = vmul.f32 %v71, %v75
    %vm77 = vweird.f32 %v70
    %vm78 = vweird.f32 %v71
    %vm79 = vmor %vm77, %vm78
    %v80 = vsel %vm79, %v71, %v76
    %v81 = vmul.f32 %v69, %v80
    %v82 = vperm.slane %v57, 0
    %v83 = vmul.f32 %v81, %v82
    %v84 = vperm.slane %v57, 1
    %v85 = vadd.f32 %v83, %v84
    %v86 = vld [vmem:[#allocation4] sm:$0xff]
    %v87 = vld [vmem:[#allocation4 + $0x8] sm:$0xff]
    %v88 = vld [vmem:[#allocation4 + $0x10] sm:$0xff]
    %v89 = vld [vmem:[#allocation4 + $0x18] sm:$0xff]
    %v90 = vld [vmem:[#allocation4 + $0x20] sm:$0xff]
    %v91 = vld [vmem:[#allocation4 + $0x28] sm:$0xff]
    %v92 = vld [vmem:[#allocation4 + $0x30] sm:$0xff]
    %v93 = vld [vmem:[#allocation4 + $0x38] sm:$0xff]
    %v94 = vld [vmem:[#allocation4 + $0x40] sm:$0xff]
    %v95 = vld [vmem:[#allocation4 + $0x48] sm:$0xff]
    %v96 = vld [vmem:[#allocation4 + $0x50] sm:$0xff]
    %v97 = vld [vmem:[#allocation4 + $0x58] sm:$0xff]
    %v98 = vld [vmem:[#allocation4 + $0x60] sm:$0xff]
    %v99 = vld [vmem:[#allocation4 + $0x68] sm:$0xff]
    %v100 = vld [vmem:[#allocation4 + $0x70] sm:$0xff]
    %v101 = vld [vmem:[#allocation4 + $0x78] sm:$0xff]
    %v102 = vperm.slane %v57, 2
    %v103 = vand.u32 %v101, 4294901760
    %104 = vmatpush.msra.mxu0 %v103
    %v105 = vand.u32 %v100, 4294901760
    %106 = vmatpush.msra.mxu0 %v105
    %v107 = vand.u32 %v99, 4294901760
    %108 = vmatpush.msra.mxu0 %v107
    %v109 = vand.u32 %v98, 4294901760
    %110 = vmatpush.msra.mxu0 %v109
    %v111 = vand.u32 %v97, 4294901760
    %112 = vmatpush.msra.mxu0 %v111
    %v113 = vand.u32 %v96, 4294901760
    %114 = vmatpush.msra.mxu0 %v113
    %v115 = vand.u32 %v95, 4294901760
    %116 = vmatpush.msra.mxu0 %v115
    %v117 = vand.u32 %v94, 4294901760
    %118 = vmatpush.msra.mxu0 %v117
    %v119 = vand.u32 %v93, 4294901760
    %120 = vmatpush.msra.mxu0 %v119
    %v121 = vand.u32 %v92, 4294901760
    %122 = vmatpush.msra.mxu0 %v121
    %v123 = vand.u32 %v91, 4294901760
    %124 = vmatpush.msra.mxu0 %v123
    %v125 = vand.u32 %v90, 4294901760
    %126 = vmatpush.msra.mxu0 %v125
    %v127 = vand.u32 %v89, 4294901760
    %128 = vmatpush.msra.mxu0 %v127
    %v129 = vand.u32 %v88, 4294901760
    %130 = vmatpush.msra.mxu0 %v129
    %v131 = vand.u32 %v87, 4294901760
    %132 = vmatpush.msra.mxu0 %v131
    %v133 = vand.u32 %v86, 4294901760
    %134 = vmatpush.msra.mxu0 %v133
    %v135 = vand.u32 %v85, 4294901760
    %v136 = vsub.f32 %v85, %v135
    %v137 = vand.u32 %v136, 4294901760
    %v138 = vsub.f32 %v136, %v137
    %v139 = vand.u32 %v138, 4294901760
    %140 = vmatmul.f32.gmra.mxu0 %v139
    %v141 = vpop.f32.mrf.mxu0
    %v142 = vadd.f32 %v102, %v141
    %143 = vdwg.mxu0
    %v144 = vand.u32 %v101, 4294901760
    %v145 = vsub.f32 %v101, %v144
    %v146 = vand.u32 %v145, 4294901760
    %v147 = vsub.f32 %v145, %v146
    %v148 = vand.u32 %v147, 4294901760
    %149 = vmatpush.msra.mxu0 %v148
    %v150 = vand.u32 %v100, 4294901760
    %v151 = vsub.f32 %v100, %v150
    %v152 = vand.u32 %v151, 4294901760
    %v153 = vsub.f32 %v151, %v152
    %v154 = vand.u32 %v153, 4294901760
    %155 = vmatpush.msra.mxu0 %v154
    %v156 = vand.u32 %v99, 4294901760
    %v157 = vsub.f32 %v99, %v156
    %v158 = vand.u32 %v157, 4294901760
    %v159 = vsub.f32 %v157, %v158
    %v160 = vand.u32 %v159, 4294901760
    %161 = vmatpush.msra.mxu0 %v160
    %v162 = vand.u32 %v98, 4294901760
    %v163 = vsub.f32 %v98, %v162
    %v164 = vand.u32 %v163, 4294901760
    %v165 = vsub.f32 %v163, %v164
    %v166 = vand.u32 %v165, 4294901760
    %167 = vmatpush.msra.mxu0 %v166
    %v168 = vand.u32 %v97, 4294901760
    %v169 = vsub.f32 %v97, %v168
    %v170 = vand.u32 %v169, 4294901760
    %v171 = vsub.f32 %v169, %v170
    %v172 = vand.u32 %v171, 4294901760
    %173 = vmatpush.msra.mxu0 %v172
    %v174 = vand.u32 %v96, 4294901760
    %v175 = vsub.f32 %v96, %v174
    %v176 = vand.u32 %v175, 4294901760
    %v177 = vsub.f32 %v175, %v176
    %v178 = vand.u32 %v177, 4294901760
    %179 = vmatpush.msra.mxu0 %v178
    %v180 = vand.u32 %v95, 4294901760
    %v181 = vsub.f32 %v95, %v180
    %v182 = vand.u32 %v181, 4294901760
    %v183 = vsub.f32 %v181, %v182
    %v184 = vand.u32 %v183, 4294901760
    %185 = vmatpush.msra.mxu0 %v184
    %v186 = vand.u32 %v94, 4294901760
    %v187 = vsub.f32 %v94, %v186
    %v188 = vand.u32 %v187, 4294901760
    %v189 = vsub.f32 %v187, %v188
    %v190 = vand.u32 %v189, 4294901760
    %191 = vmatpush.msra.mxu0 %v190
    %v192 = vand.u32 %v93, 4294901760
    %v193 = vsub.f32 %v93, %v192
    %v194 = vand.u32 %v193, 4294901760
    %v195 = vsub.f32 %v193, %v194
    %v196 = vand.u32 %v195, 4294901760
    %197 = vmatpush.msra.mxu0 %v196
    %v198 = vand.u32 %v92, 4294901760
    %v199 = vsub.f32 %v92, %v198
    %v200 = vand.u32 %v199, 4294901760
    %v201 = vsub.f32 %v199, %v200
    %v202 = vand.u32 %v201, 4294901760
    %203 = vmatpush.msra.mxu0 %v202
    %v204 = vand.u32 %v91, 4294901760
    %v205 = vsub.f32 %v91, %v204
    %v206 = vand.u32 %v205, 4294901760
    %v207 = vsub.f32 %v205, %v206
    %v208 = vand.u32 %v207, 4294901760
    %209 = vmatpush.msra.mxu0 %v208
    %v210 = vand.u32 %v90, 4294901760
    %v211 = vsub.f32 %v90, %v210
    %v212 = vand.u32 %v211, 4294901760
    %v213 = vsub.f32 %v211, %v212
    %v214 = vand.u32 %v213, 4294901760
    %215 = vmatpush.msra.mxu0 %v214
    %v216 = vand.u32 %v89, 4294901760
    %v217 = vsub.f32 %v89, %v216
    %v218 = vand.u32 %v217, 4294901760
    %v219 = vsub.f32 %v217, %v218
    %v220 = vand.u32 %v219, 4294901760
    %221 = vmatpush.msra.mxu0 %v220
    %v222 = vand.u32 %v88, 4294901760
    %v223 = vsub.f32 %v88, %v222
    %v224 = vand.u32 %v223, 4294901760
    %v225 = vsub.f32 %v223, %v224
    %v226 = vand.u32 %v225, 4294901760
    %227 = vmatpush.msra.mxu0 %v226
    %v228 = vand.u32 %v87, 4294901760
    %v229 = vsub.f32 %v87, %v228
    %v230 = vand.u32 %v229, 4294901760
    %v231 = vsub.f32 %v229, %v230
    %v232 = vand.u32 %v231, 4294901760
    %233 = vmatpush.msra.mxu0 %v232
    %v234 = vand.u32 %v86, 4294901760
    %v235 = vsub.f32 %v86, %v234
    %v236 = vand.u32 %v235, 4294901760
    %v237 = vsub.f32 %v235, %v236
    %v238 = vand.u32 %v237, 4294901760
    %239 = vmatpush.msra.mxu0 %v238
    %v240 = vand.u32 %v85, 4294901760
    %241 = vmatmul.f32.gmra.mxu0 %v240
    %v242 = vpop.f32.mrf.mxu0
    %v243 = vadd.f32 %v142, %v242
    %244 = vdwg.mxu0
    %v245 = vand.u32 %v101, 4294901760
    %v246 = vsub.f32 %v101, %v245
    %247 = vmatpush.msra.mxu0 %v246
    %v248 = vand.u32 %v100, 4294901760
    %v249 = vsub.f32 %v100, %v248
    %250 = vmatpush.msra.mxu0 %v249
    %v251 = vand.u32 %v99, 4294901760
    %v252 = vsub.f32 %v99, %v251
    %253 = vmatpush.msra.mxu0 %v252
    %v254 = vand.u32 %v98, 4294901760
    %v255 = vsub.f32 %v98, %v254
    %256 = vmatpush.msra.mxu0 %v255
    %v257 = vand.u32 %v97, 4294901760
    %v258 = vsub.f32 %v97, %v257
    %259 = vmatpush.msra.mxu0 %v258
    %v260 = vand.u32 %v96, 4294901760
    %v261 = vsub.f32 %v96, %v260
    %262 = vmatpush.msra.mxu0 %v261
    %v263 = vand.u32 %v95, 4294901760
    %v264 = vsub.f32 %v95, %v263
    %265 = vmatpush.msra.mxu0 %v264
    %v266 = vand.u32 %v94, 4294901760
    %v267 = vsub.f32 %v94, %v266
    %268 = vmatpush.msra.mxu0 %v267
    %v269 = vand.u32 %v93, 4294901760
    %v270 = vsub.f32 %v93, %v269
    %271 = vmatpush.msra.mxu0 %v270
    %v272 = vand.u32 %v92, 4294901760
    %v273 = vsub.f32 %v92, %v272
    %274 = vmatpush.msra.mxu0 %v273
    %v275 = vand.u32 %v91, 4294901760
    %v276 = vsub.f32 %v91, %v275
    %277 = vmatpush.msra.mxu0 %v276
    %v278 = vand.u32 %v90, 4294901760
    %v279 = vsub.f32 %v90, %v278
    %280 = vmatpush.msra.mxu0 %v279
    %v281 = vand.u32 %v89, 4294901760
    %v282 = vsub.f32 %v89, %v281
    %283 = vmatpush.msra.mxu0 %v282
    %v284 = vand.u32 %v88, 4294901760
    %v285 = vsub.f32 %v88, %v284
    %286 = vmatpush.msra.mxu0 %v285
    %v287 = vand.u32 %v87, 4294901760
    %v288 = vsub.f32 %v87, %v287
    %289 = vmatpush.msra.mxu0 %v288
    %v290 = vand.u32 %v86, 4294901760
    %v291 = vsub.f32 %v86, %v290
    %292 = vmatpush.msra.mxu0 %v291
    %v293 = vand.u32 %v85, 4294901760
    %v294 = vsub.f32 %v85, %v293
    %295 = vmatmul.f32.gmra.mxu0 %v294
    %v296 = vpop.f32.mrf.mxu0
    %v297 = vadd.f32 %v243, %v296
    %298 = vdwg.mxu0
    %v299 = vand.u32 %v101, 4294901760
    %300 = vmatpush.msra.mxu0 %v299
    %v301 = vand.u32 %v100, 4294901760
    %302 = vmatpush.msra.mxu0 %v301
    %v303 = vand.u32 %v99, 4294901760
    %304 = vmatpush.msra.mxu0 %v303
    %v305 = vand.u32 %v98, 4294901760
    %306 = vmatpush.msra.mxu0 %v305
    %v307 = vand.u32 %v97, 4294901760
    %308 = vmatpush.msra.mxu0 %v307
    %v309 = vand.u32 %v96, 4294901760
    %310 = vmatpush.msra.mxu0 %v309
    %v311 = vand.u32 %v95, 4294901760
    %312 = vmatpush.msra.mxu0 %v311
    %v313 = vand.u32 %v94, 4294901760
    %314 = vmatpush.msra.mxu0 %v313
    %v315 = vand.u32 %v93, 4294901760
    %316 = vmatpush.msra.mxu0 %v315
    %v317 = vand.u32 %v92, 4294901760
    %318 = vmatpush.msra.mxu0 %v317
    %v319 = vand.u32 %v91, 4294901760
    %320 = vmatpush.msra.mxu0 %v319
    %v321 = vand.u32 %v90, 4294901760
    %322 = vmatpush.msra.mxu0 %v321
    %v323 = vand.u32 %v89, 4294901760
    %324 = vmatpush.msra.mxu0 %v323
    %v325 = vand.u32 %v88, 4294901760
    %326 = vmatpush.msra.mxu0 %v325
    %v327 = vand.u32 %v87, 4294901760
    %328 = vmatpush.msra.mxu0 %v327
    %v329 = vand.u32 %v86, 4294901760
    %330 = vmatpush.msra.mxu0 %v329
    %v331 = vand.u32 %v85, 4294901760
    %v332 = vsub.f32 %v85, %v331
    %v333 = vand.u32 %v332, 4294901760
    %334 = vmatmul.f32.gmra.mxu0 %v333
    %v335 = vpop.f32.mrf.mxu0
    %v336 = vadd.f32 %v297, %v335
    %337 = vdwg.mxu0
    %v338 = vand.u32 %v101, 4294901760
    %v339 = vsub.f32 %v101, %v338
    %v340 = vand.u32 %v339, 4294901760
    %341 = vmatpush.msra.mxu0 %v340
    %v342 = vand.u32 %v100, 4294901760
    %v343 = vsub.f32 %v100, %v342
    %v344 = vand.u32 %v343, 4294901760
    %345 = vmatpush.msra.mxu0 %v344
    %v346 = vand.u32 %v99, 4294901760
    %v347 = vsub.f32 %v99, %v346
    %v348 = vand.u32 %v347, 4294901760
    %349 = vmatpush.msra.mxu0 %v348
    %v350 = vand.u32 %v98, 4294901760
    %v351 = vsub.f32 %v98, %v350
    %v352 = vand.u32 %v351, 4294901760
    %353 = vmatpush.msra.mxu0 %v352
    %v354 = vand.u32 %v97, 4294901760
    %v355 = vsub.f32 %v97, %v354
    %v356 = vand.u32 %v355, 4294901760
    %357 = vmatpush.msra.mxu0 %v356
    %v358 = vand.u32 %v96, 4294901760
    %v359 = vsub.f32 %v96, %v358
    %v360 = vand.u32 %v359, 4294901760
    %361 = vmatpush.msra.mxu0 %v360
    %v362 = vand.u32 %v95, 4294901760
    %v363 = vsub.f32 %v95, %v362
    %v364 = vand.u32 %v363, 4294901760
    %365 = vmatpush.msra.mxu0 %v364
    %v366 = vand.u32 %v94, 4294901760
    %v367 = vsub.f32 %v94, %v366
    %v368 = vand.u32 %v367, 4294901760
    %369 = vmatpush.msra.mxu0 %v368
    %v370 = vand.u32 %v93, 4294901760
    %v371 = vsub.f32 %v93, %v370
    %v372 = vand.u32 %v371, 4294901760
    %373 = vmatpush.msra.mxu0 %v372
    %v374 = vand.u32 %v92, 4294901760
    %v375 = vsub.f32 %v92, %v374
    %v376 = vand.u32 %v375, 4294901760
    %377 = vmatpush.msra.mxu0 %v376
    %v378 = vand.u32 %v91, 4294901760
    %v379 = vsub.f32 %v91, %v378
    %v380 = vand.u32 %v379, 4294901760
    %381 = vmatpush.msra.mxu0 %v380
    %v382 = vand.u32 %v90, 4294901760
    %v383 = vsub.f32 %v90, %v382
    %v384 = vand.u32 %v383, 4294901760
    %385 = vmatpush.msra.mxu0 %v384
    %v386 = vand.u32 %v89, 4294901760
    %v387 = vsub.f32 %v89, %v386
    %v388 = vand.u32 %v387, 4294901760
    %389 = vmatpush.msra.mxu0 %v388
    %v390 = vand.u32 %v88, 4294901760
    %v391 = vsub.f32 %v88, %v390
    %v392 = vand.u32 %v391, 4294901760
    %393 = vmatpush.msra.mxu0 %v392
    %v394 = vand.u32 %v87, 4294901760
    %v395 = vsub.f32 %v87, %v394
    %v396 = vand.u32 %v395, 4294901760
    %397 = vmatpush.msra.mxu0 %v396
    %v398 = vand.u32 %v86, 4294901760
    %v399 = vsub.f32 %v86, %v398
    %v400 = vand.u32 %v399, 4294901760
    %401 = vmatpush.msra.mxu0 %v400
    %v402 = vand.u32 %v85, 4294901760
    %403 = vmatmul.f32.gmra.mxu0 %v402
    %v404 = vpop.f32.mrf.mxu0
    %v405 = vadd.f32 %v336, %v404
    %406 = vdwg.mxu0
    %v407 = vand.u32 %v101, 4294901760
    %408 = vmatpush.msra.mxu0 %v407
    %v409 = vand.u32 %v100, 4294901760
    %410 = vmatpush.msra.mxu0 %v409
    %v411 = vand.u32 %v99, 4294901760
    %412 = vmatpush.msra.mxu0 %v411
    %v413 = vand.u32 %v98, 4294901760
    %414 = vmatpush.msra.mxu0 %v413
    %v415 = vand.u32 %v97, 4294901760
    %416 = vmatpush.msra.mxu0 %v415
    %v417 = vand.u32 %v96, 4294901760
    %418 = vmatpush.msra.mxu0 %v417
    %v419 = vand.u32 %v95, 4294901760
    %420 = vmatpush.msra.mxu0 %v419
    %v421 = vand.u32 %v94, 4294901760
    %422 = vmatpush.msra.mxu0 %v421
    %v423 = vand.u32 %v93, 4294901760
    %424 = vmatpush.msra.mxu0 %v423
    %v425 = vand.u32 %v92, 4294901760
    %426 = vmatpush.msra.mxu0 %v425
    %v427 = vand.u32 %v91, 4294901760
    %428 = vmatpush.msra.mxu0 %v427
    %v429 = vand.u32 %v90, 4294901760
    %430 = vmatpush.msra.mxu0 %v429
    %v431 = vand.u32 %v89, 4294901760
    %432 = vmatpush.msra.mxu0 %v431
    %v433 = vand.u32 %v88, 4294901760
    %434 = vmatpush.msra.mxu0 %v433
    %v435 = vand.u32 %v87, 4294901760
    %436 = vmatpush.msra.mxu0 %v435
    %v437 = vand.u32 %v86, 4294901760
    %438 = vmatpush.msra.mxu0 %v437
    %v439 = vand.u32 %v85, 4294901760
    %440 = vmatmul.f32.gmra.mxu0 %v439
    %v441 = vpop.f32.mrf.mxu0
    %v442 = vadd.f32 %v405, %v441
    %443 = vdwg.mxu0
    %v444 = vmul.f32 %v442, %v85
    %445 = vadd.xlane.f32.xlu0 %v444
    %v446 = vpop.xlane.xlu0 %445
    %vm447 = vcmask 7168
    %448 = vst.msk [vmem:[%s3] sm:$0xff] %vm447, %v446
    // Predicated region
    $region26: #{tpu_custom_call.1} parent=1 // pred_check
      _
    $region27: #{tpu_custom_call.1} parent=1 // pred_check_branch
      %450 = sbr.rel (0) target = $region29
    $region28: #{tpu_custom_call.1} parent=1 // pred_region
      _
    $region29: #{tpu_custom_call.1} parent=1 // pred_fallthru
      _
    // Predicated region
    $region30: #{tpu_custom_call.1} parent=1 // pred_check
      _
    $region31: #{tpu_custom_call.1} parent=1 // pred_check_branch
      %452 = sbr.rel (0) target = $region33
    $region32: #{tpu_custom_call.1} parent=1 // pred_region
      _
    $region33: #{tpu_custom_call.1} parent=1 // pred_fallthru
      _
    %453 = vsyncpa [#allocation3], 1
    %454 = vsyncpa [#allocation5], 1

</llo_original>
